<compile_context>
chip_gen: v5e
topology: v5e:2x2
jax: 0.10.0
libtpu: 0.0.40
codegen_flags: <defaults>
</compile_context>

<pallas_src>
import functools

import jax
import jax.numpy as jnp
from jax.experimental import pallas as pl
from jax.experimental.pallas import tpu as pltpu


def _cdiv(a, b):
    return (a + b - 1) // b


def _round_up(x, m):
    return _cdiv(x, m) * m


# --------------------------------------------------------------------------- #
# Kernel body
# --------------------------------------------------------------------------- #
def _adapter_kernel(*refs, n_weights):
    # refs = (x_ref, w_0_ref, ..., w_{n-1}_ref, o_ref)
    x_ref = refs[0]
    w_refs = refs[1:1 + n_weights]
    o_ref = refs[1 + n_weights]

    # bf16 operands into the MXU, f32 accumulation. x may arrive as f32 (fast
    # path, no wrapper pad/cast) -> cast here, it hides under MXU/DMA slack.
    h = x_ref[...].astype(jnp.bfloat16)                          # (TM, D_in)
    for w_ref in w_refs[:-1]:
        acc = jnp.dot(h, w_ref[...], preferred_element_type=jnp.float32)
        # ReLU (Dropout in eval mode == identity); back to bf16 for the next dot.
        h = jnp.maximum(acc, 0.0).astype(jnp.bfloat16)
    out = jnp.dot(h, w_refs[-1][...], preferred_element_type=jnp.float32)
    o_ref[...] = out.astype(o_ref.dtype)


# --------------------------------------------------------------------------- #
# One-time weight preparation (pad to 128 multiples, cast to bf16). Cache the
# result and reuse it across forward calls.
# --------------------------------------------------------------------------- #
def prepare_adapter_weights(weights):
    """weights: list of (in, out) f32 arrays (== PyTorch nn.Linear.weight.T).
    Returns list of lane/sublane-aligned bf16 arrays."""
    w_pads = []
    for w in weights:
        d_in, d_out = w.shape
        d_in_p, d_out_p = _round_up(d_in, 128), _round_up(d_out, 128)
        wp = w.astype(jnp.bfloat16)
        if (d_in_p, d_out_p) != (d_in, d_out):
            wp = jnp.zeros((d_in_p, d_out_p), jnp.bfloat16).at[:d_in, :d_out].set(wp)
        w_pads.append(wp)
    return w_pads


def _choose_tile(batch, block_m, sublane):
    """Balanced batch tiles: pad waste < one sublane group; >=2 grid steps for
    moderate batches so v7x's two TensorCores both get work."""
    n_tiles = max(1, _cdiv(batch, block_m))
    tm = _round_up(_cdiv(batch, n_tiles), sublane)
    if _round_up(batch, tm) == tm and tm % (2 * sublane) == 0:
        tm //= 2                     # single tile -> split so grid has 2 steps
    return tm, _round_up(batch, tm)


# --------------------------------------------------------------------------- #
# Forward
# --------------------------------------------------------------------------- #
def adapter_forward(x, w_pads, *, out_dim=None, block_m=512,
                    out_dtype=jnp.float32):
    """x: (B, input_dim) f32; w_pads: output of prepare_adapter_weights().
    Returns (B, out_dim) in out_dtype."""
    batch, in_dim = x.shape
    n_w = len(w_pads)
    in_p = w_pads[0].shape[0]
    out_p = w_pads[-1].shape[1]
    out_dim = out_p if out_dim is None else out_dim

    feat_aligned = (in_p == in_dim)

    # Fast path: f32 x straight into the kernel (sublane granule 8), no pad/cast.
    tm, batch_p = _choose_tile(batch, block_m, 8)
    if feat_aligned and batch_p == batch:
        x_in = x
    else:
        # Padded path: pad once to bf16 (halves the padded-activation traffic).
        tm, batch_p = _choose_tile(batch, block_m, 16)
        x_in = jnp.zeros((batch_p, in_p), jnp.bfloat16).at[:batch, :in_dim].set(
            x.astype(jnp.bfloat16))

    grid = (batch_p // tm,)

    in_specs = [pl.BlockSpec((tm, in_p), lambda i: (i, 0))]
    for wp in w_pads:
        # Constant block index -> weights DMA'd once; Buffered(1) avoids wasting
        # VMEM on a second (never used) weight buffer.
        in_specs.append(pl.BlockSpec(wp.shape, lambda i: (0, 0),
                                     pipeline_mode=pl.Buffered(1)))
    out_specs = pl.BlockSpec((tm, out_p), lambda i: (i, 0))

    out_bytes = jnp.dtype(out_dtype).itemsize
    weight_bytes = sum(int(wp.size) * wp.dtype.itemsize for wp in w_pads)

    # ---- cost estimate (helps XLA overlap this small custom call) ----
    flops = 2 * batch_p * sum(wp.shape[0] * wp.shape[1] for wp in w_pads)
    bytes_accessed = (int(x_in.size) * x_in.dtype.itemsize
                      + weight_bytes
                      + batch_p * out_p * out_bytes)
    cost = pl.CostEstimate(flops=flops, transcendentals=0,
                           bytes_accessed=bytes_accessed)

    # ---- VMEM budget: resident (single-buffered) weights + double-buffered
    #      activation/output tiles + Mosaic scratch headroom. ----
    vmem_needed = (2 * tm * in_p * x_in.dtype.itemsize
                   + 2 * tm * out_p * out_bytes
                   + weight_bytes
                   + (4 << 20))
    vmem_limit = int(min(vmem_needed, 56 << 20))

    kernel = functools.partial(_adapter_kernel, n_weights=n_w)

    out_padded = pl.pallas_call(
        kernel,
        out_shape=jax.ShapeDtypeStruct((batch_p, out_p), out_dtype),
        grid=grid,
        in_specs=in_specs,
        out_specs=out_specs,
        compiler_params=pltpu.CompilerParams(
            dimension_semantics=("parallel",),   # shard batch tiles across TCs
            vmem_limit_bytes=vmem_limit),
        cost_estimate=cost,
    )(x_in, *w_pads)

    if batch_p != batch or out_p != out_dim:
        return out_padded[:batch, :out_dim]
    return out_padded


# --------------------------------------------------------------------------- #
# Init & reference (for the self-test)
# --------------------------------------------------------------------------- #
def make_adapter_weights(key, input_dim, output_dim, config):
    """Kaiming-uniform-like init; shapes match the PyTorch module but stored as
    (in, out) == W_pytorch.T."""
    hidden_dim = input_dim // config['reduction']
    dims = [(input_dim, hidden_dim)]
    for _ in range(config['n_layers'] - 1):
        dims.append((hidden_dim, hidden_dim))
    dims.append((hidden_dim, output_dim))

    weights = []
    for i, (d_in, d_out) in enumerate(dims):
        k = jax.random.fold_in(key, i)
        bound = 1.0 / jnp.sqrt(jnp.float32(d_in))
        w = jax.random.uniform(k, (d_in, d_out), jnp.float32, -bound, bound)
        weights.append(w)
    return weights


def adapter_reference(x, weights):
    """bf16-operand / f32-accumulate reference matching the kernel's numerics."""
    h = x.astype(jnp.bfloat16)
    for w in weights[:-1]:
        acc = jnp.dot(h, w.astype(jnp.bfloat16),
                      preferred_element_type=jnp.float32)
        h = jnp.maximum(acc, 0.0).astype(jnp.bfloat16)
    return jnp.dot(h, weights[-1].astype(jnp.bfloat16),
                   preferred_element_type=jnp.float32)


if __name__ == "__main__":
    config = {'reduction': 2, 'dropout': 0.1, 'n_layers': 2}
    input_dim = 256
    output_dim = 128
    batch = 8

    key = jax.random.PRNGKey(0)
    kx, kw = jax.random.split(key)
    x = jax.random.normal(kx, (batch, input_dim), jnp.float32)
    weights = make_adapter_weights(kw, input_dim, output_dim, config)

    # One-time weight preparation (pad + bf16 cast), reused every forward call.
    w_pads = prepare_adapter_weights(weights)

    fwd = jax.jit(functools.partial(adapter_forward, out_dim=output_dim))
    out = fwd(x, w_pads)
    out = jax.block_until_ready(out)

    ref = adapter_reference(x, weights)
    assert out.shape == (batch, output_dim)
    assert jnp.allclose(out, ref, atol=1e-2, rtol=1e-2), "mismatch vs reference"

    print("KERNEL_OK")
</pallas_src>

<mosaic_0001>
module attributes {stable_mosaic.version = 11 : i64} {
  func.func @_adapter_kernel(%arg0: i32, %arg1: memref<8x256xf32, #tpu.memory_space<vmem>>, %arg2: memref<256x128xbf16, #tpu.memory_space<vmem>>, %arg3: memref<128x128xbf16, #tpu.memory_space<vmem>>, %arg4: memref<128x128xbf16, #tpu.memory_space<vmem>>, %arg5: memref<8x128xf32, #tpu.memory_space<vmem>>) attributes {dimension_semantics = [#tpu.dimension_semantics<parallel>], iteration_bounds = array<i64: 1>, scalar_prefetch = 0 : i64, scratch_operands = 0 : i64, tpu.core_type = #tpu.core_type<tc>, window_params = [{transform_indices = @transform_0, window_bounds = array<i64: 8, 256>}, {pipeline_mode = #tpu.pipeline_mode<synchronous>, transform_indices = @transform_1, window_bounds = array<i64: 256, 128>}, {pipeline_mode = #tpu.pipeline_mode<synchronous>, transform_indices = @transform_2, window_bounds = array<i64: 128, 128>}, {pipeline_mode = #tpu.pipeline_mode<synchronous>, transform_indices = @transform_3, window_bounds = array<i64: 128, 128>}, {transform_indices = @transform_4, window_bounds = array<i64: 8, 128>}]} {
    %c0 = arith.constant 0 : index
    %c0_0 = arith.constant 0 : index
    %0 = vector.load %arg1[%c0, %c0_0] : memref<8x256xf32, #tpu.memory_space<vmem>>, vector<8x256xf32>
    %1 = arith.truncf %0 : vector<8x256xf32> to vector<8x256xbf16>
    %c0_1 = arith.constant 0 : index
    %c0_2 = arith.constant 0 : index
    %2 = vector.load %arg2[%c0_1, %c0_2] : memref<256x128xbf16, #tpu.memory_space<vmem>>, vector<256x128xbf16>
    %cst = arith.constant dense<0.000000e+00> : vector<8x128xf32>
    %3 = tpu.matmul %1, %2, %cst {dimension_numbers = #tpu.dot_dimension_numbers<[1], [0], [0], [1], [0, 0, 1, 1], [], []>} : vector<8x256xbf16>, vector<256x128xbf16>, vector<8x128xf32> -> vector<8x128xf32>
    %cst_3 = arith.constant 0.000000e+00 : f32
    %4 = vector.broadcast %cst_3 : f32 to vector<8x128xf32>
    %5 = arith.maximumf %3, %4 : vector<8x128xf32>
    %6 = arith.truncf %5 : vector<8x128xf32> to vector<8x128xbf16>
    %c0_4 = arith.constant 0 : index
    %c0_5 = arith.constant 0 : index
    %7 = vector.load %arg3[%c0_4, %c0_5] : memref<128x128xbf16, #tpu.memory_space<vmem>>, vector<128x128xbf16>
    %cst_6 = arith.constant dense<0.000000e+00> : vector<8x128xf32>
    %8 = tpu.matmul %6, %7, %cst_6 {dimension_numbers = #tpu.dot_dimension_numbers<[1], [0], [0], [1], [0, 0, 1, 1], [], []>} : vector<8x128xbf16>, vector<128x128xbf16>, vector<8x128xf32> -> vector<8x128xf32>
    %cst_7 = arith.constant 0.000000e+00 : f32
    %9 = vector.broadcast %cst_7 : f32 to vector<8x128xf32>
    %10 = arith.maximumf %8, %9 : vector<8x128xf32>
    %11 = arith.truncf %10 : vector<8x128xf32> to vector<8x128xbf16>
    %c0_8 = arith.constant 0 : index
    %c0_9 = arith.constant 0 : index
    %12 = vector.load %arg4[%c0_8, %c0_9] : memref<128x128xbf16, #tpu.memory_space<vmem>>, vector<128x128xbf16>
    %cst_10 = arith.constant dense<0.000000e+00> : vector<8x128xf32>
    %13 = tpu.matmul %11, %12, %cst_10 {dimension_numbers = #tpu.dot_dimension_numbers<[1], [0], [0], [1], [0, 0, 1, 1], [], []>} : vector<8x128xbf16>, vector<128x128xbf16>, vector<8x128xf32> -> vector<8x128xf32>
    %c0_11 = arith.constant 0 : index
    %c0_12 = arith.constant 0 : index
    %14 = vector.load %arg5[%c0_11, %c0_12] : memref<8x128xf32, #tpu.memory_space<vmem>>, vector<8x128xf32>
    tpu.vector_store %arg5[%c0_11, %c0_12], %13 {strides = array<i32>} : memref<8x128xf32, #tpu.memory_space<vmem>>, vector<8x128xf32>,
    return
  }
  func.func @transform_0(%arg0: i32) -> (i32, i32) {
    %c0_i32 = arith.constant 0 : i32
    %c0_i32_0 = arith.constant 0 : i32
    return %arg0, %c0_i32 : i32, i32
  }
  func.func @transform_1(%arg0: i32) -> (i32, i32) {
    %c0_i32 = arith.constant 0 : i32
    %c0_i32_0 = arith.constant 0 : i32
    %c0_i32_1 = arith.constant 0 : i32
    return %c0_i32, %c0_i32_0 : i32, i32
  }
  func.func @transform_2(%arg0: i32) -> (i32, i32) {
    %c0_i32 = arith.constant 0 : i32
    %c0_i32_0 = arith.constant 0 : i32
    %c0_i32_1 = arith.constant 0 : i32
    return %c0_i32, %c0_i32_0 : i32, i32
  }
  func.func @transform_3(%arg0: i32) -> (i32, i32) {
    %c0_i32 = arith.constant 0 : i32
    %c0_i32_0 = arith.constant 0 : i32
    %c0_i32_1 = arith.constant 0 : i32
    return %c0_i32, %c0_i32_0 : i32, i32
  }
  func.func @transform_4(%arg0: i32) -> (i32, i32) {
    %c0_i32 = arith.constant 0 : i32
    %c0_i32_0 = arith.constant 0 : i32
    return %arg0, %c0_i32 : i32, i32
  }
}

</mosaic_0001>

<llo_original>
// kernel: adapter_forward.1
$region0: #{adapter_forward.1}
  #allocation0 [shape = 'u32[]', space=smem, size = 0x4, offset = 0x4, fixed_abs, tag = 'smem constant byte address 0x4 - core index']
  #allocation1 [shape = 'u32[72,128]{1,0:T(1,128)}', space=vmem, size = 0x9000, scoped, tag = 'internal scratch']
  %s0 = inlined_call_operand.hbm [shape: f32[8,256], index: 0, kind: input, shape index: {}]
  %s1 = inlined_call_operand.hbm [shape: bf16[256,128], index: 1, kind: input, shape index: {}]
  %s2 = inlined_call_operand.hbm [shape: bf16[128,128], index: 2, kind: input, shape index: {}]
  %s3 = inlined_call_operand.hbm [shape: bf16[128,128], index: 3, kind: input, shape index: {}]
  %s4 = inlined_call_operand.hbm [shape: f32[8,128], index: 4, kind: output, shape index: {}]
  %s5 = sld [smem:[#allocation0]]
  $region42: #{adapter_forward.1} parent=0
    _
  %s7 = ssub.s32 1, %s5
  %s8 = scalar_select 0, %s7, %s5
  $region1: #{adapter_forward.1} parent=0
    #allocation2 [shape = 'u8[8192]{0}', space=vmem, size = 0x2000, scoped, tag = 'input window, operand 0, single buffered']
    #allocation3 [shape = 's32[1]{0}', space=sflag, size = 0x4, scoped, tag = 'scoped memory for adapter_forward.1']
    #allocation4 [shape = 's32[1]{0}', space=sflag, size = 0x4, scoped, tag = 'scoped memory for adapter_forward.1']
    #allocation5 [shape = 'u8[65536]{0}', space=vmem, size = 0x10000, scoped, tag = 'input window, operand 1, single buffered']
    #allocation6 [shape = 's32[1]{0}', space=sflag, size = 0x4, scoped, tag = 'scoped memory for adapter_forward.1']
    #allocation7 [shape = 'u8[32768]{0}', space=vmem, size = 0x8000, scoped, tag = 'input window, operand 2, single buffered']
    #allocation8 [shape = 'u8[32768]{0}', space=vmem, size = 0x8000, scoped, tag = 'input window, operand 3, single buffered']
    #allocation9 [shape = 's32[1]{0}', space=sflag, size = 0x4, scoped, tag = 'scoped memory for adapter_forward.1']
    #allocation10 [shape = 'u8[4096]{0}', space=vmem, size = 0x1000, scoped, tag = 'output window, operand 0, single buffered']
    %9 = vsyncpa [#allocation3], 0
    %10 = vsyncpa [#allocation6], 0
    %11 = vsyncpa [#allocation9], 0
    %12 = vsyncpa [#allocation4], 0
    // Predicated region
    $region2: #{adapter_forward.1} parent=1 // pred_check
      _
    $region3: #{adapter_forward.1} parent=1 // pred_check_branch
      %14 = sbr.rel (0) target = $region5
    $region4: #{adapter_forward.1} parent=1 // pred_region
      %16 = vsyncadd [#allocation3], 0
      %s18 = sshll.u32 %s0, 4
      %s19 = int_to_ptr.hbm [resolvable:$true] %s18
      %s20 = sshll.u32 [#allocation2], 4
      %s21 = int_to_ptr.vmem [resolvable:$true] %s20
      %23 = dma.hbm_to_vmem [thread:$0]  %s19, 256, %s21, [#allocation3]
    $region5: #{adapter_forward.1} parent=1 // pred_fallthru
      _
    // Predicated region
    $region6: #{adapter_forward.1} parent=1 // pred_check
      _
    $region7: #{adapter_forward.1} parent=1 // pred_check_branch
      %25 = sbr.rel (0) target = $region9
    $region8: #{adapter_forward.1} parent=1 // pred_region
      %27 = vsyncadd [#allocation6], 0
      %s28 = sshll.u32 %s1, 4
      %s29 = int_to_ptr.hbm [resolvable:$true] %s28
      %s30 = sshll.u32 [#allocation5], 4
      %s31 = int_to_ptr.vmem [resolvable:$true] %s30
      %36 = dma.hbm_to_vmem [thread:$0]  %s29, 2048, %s31, [#allocation6], 64, 64, 4
    $region9: #{adapter_forward.1} parent=1 // pred_fallthru
      _
    // Predicated region
    $region10: #{adapter_forward.1} parent=1 // pred_check
      _
    $region11: #{adapter_forward.1} parent=1 // pred_check_branch
      %38 = sbr.rel (0) target = $region13
    $region12: #{adapter_forward.1} parent=1 // pred_region
      %40 = vsyncadd [#allocation6], 0
      %s41 = sshll.u32 %s2, 4
      %s42 = int_to_ptr.hbm [resolvable:$true] %s41
      %s43 = sshll.u32 [#allocation7], 4
      %s44 = int_to_ptr.vmem [resolvable:$true] %s43
      %49 = dma.hbm_to_vmem [thread:$0]  %s42, 1024, %s44, [#allocation6], 64, 64, 4
    $region13: #{adapter_forward.1} parent=1 // pred_fallthru
      _
    // Predicated region
    $region14: #{adapter_forward.1} parent=1 // pred_check
      _
    $region15: #{adapter_forward.1} parent=1 // pred_check_branch
      %51 = sbr.rel (0) target = $region17
    $region16: #{adapter_forward.1} parent=1 // pred_region
      %53 = vsyncadd [#allocation9], 0
      %s54 = sshll.u32 %s3, 4
      %s55 = int_to_ptr.hbm [resolvable:$true] %s54
      %s56 = sshll.u32 [#allocation8], 4
      %s57 = int_to_ptr.vmem [resolvable:$true] %s56
      %62 = dma.hbm_to_vmem [thread:$0]  %s55, 1024, %s57, [#allocation9], 64, 64, 4
    $region17: #{adapter_forward.1} parent=1 // pred_fallthru
      _
    // Predicated region
    $region18: #{adapter_forward.1} parent=1 // pred_check
      _
    $region19: #{adapter_forward.1} parent=1 // pred_check_branch
      %64 = sbr.rel (0) target = $region21
    $region20: #{adapter_forward.1} parent=1 // pred_region
      %66 = dma.done [#allocation3], 256
    $region21: #{adapter_forward.1} parent=1 // pred_fallthru
      _
    // Predicated region
    $region22: #{adapter_forward.1} parent=1 // pred_check
      _
    $region23: #{adapter_forward.1} parent=1 // pred_check_branch
      %68 = sbr.rel (0) target = $region25
    $region24: #{adapter_forward.1} parent=1 // pred_region
      %70 = dma.done [#allocation6], 2048
    $region25: #{adapter_forward.1} parent=1 // pred_fallthru
      _
    // Predicated region
    $region26: #{adapter_forward.1} parent=1 // pred_check
      _
    $region27: #{adapter_forward.1} parent=1 // pred_check_branch
      %72 = sbr.rel (0) target = $region29
    $region28: #{adapter_forward.1} parent=1 // pred_region
      %74 = dma.done [#allocation6], 1024
    $region29: #{adapter_forward.1} parent=1 // pred_fallthru
      _
    // Predicated region
    $region30: #{adapter_forward.1} parent=1 // pred_check
      _
    $region31: #{adapter_forward.1} parent=1 // pred_check_branch
      %76 = sbr.rel (0) target = $region33
    $region32: #{adapter_forward.1} parent=1 // pred_region
      %78 = dma.done [#allocation9], 1024
    $region33: #{adapter_forward.1} parent=1 // pred_fallthru
      _
    %v79 = vld [vmem:[#allocation2] sm:$0xff]
    %v80 = vld [vmem:[#allocation2 + $0x8] sm:$0xff]
    %v81 = vpack.c.bf16 %v79, %v79
    %v82 = vpack.c.bf16 %v80, %v80
    %v83 = vld [vmem:[#allocation5] sm:$0xf]
    %v84 = vld [vmem:[#allocation5 + $0x4] sm:$0xf]
    %v85 = vld [vmem:[#allocation5 + $0x8] sm:$0xf]
    %v86 = vld [vmem:[#allocation5 + $0xc] sm:$0xf]
    %v87 = vld [vmem:[#allocation5 + $0x10] sm:$0xf]
    %v88 = vld [vmem:[#allocation5 + $0x14] sm:$0xf]
    %v89 = vld [vmem:[#allocation5 + $0x18] sm:$0xf]
    %v90 = vld [vmem:[#allocation5 + $0x1c] sm:$0xf]
    %v91 = vld [vmem:[#allocation5 + $0x20] sm:$0xf]
    %v92 = vld [vmem:[#allocation5 + $0x24] sm:$0xf]
    %v93 = vld [vmem:[#allocation5 + $0x28] sm:$0xf]
    %v94 = vld [vmem:[#allocation5 + $0x2c] sm:$0xf]
    %v95 = vld [vmem:[#allocation5 + $0x30] sm:$0xf]
    %v96 = vld [vmem:[#allocation5 + $0x34] sm:$0xf]
    %v97 = vld [vmem:[#allocation5 + $0x38] sm:$0xf]
    %v98 = vld [vmem:[#allocation5 + $0x3c] sm:$0xf]
    %v99 = vld [vmem:[#allocation5 + $0x40] sm:$0xf]
    %v100 = vld [vmem:[#allocation5 + $0x44] sm:$0xf]
    %v101 = vld [vmem:[#allocation5 + $0x48] sm:$0xf]
    %v102 = vld [vmem:[#allocation5 + $0x4c] sm:$0xf]
    %v103 = vld [vmem:[#allocation5 + $0x50] sm:$0xf]
    %v104 = vld [vmem:[#allocation5 + $0x54] sm:$0xf]
    %v105 = vld [vmem:[#allocation5 + $0x58] sm:$0xf]
    %v106 = vld [vmem:[#allocation5 + $0x5c] sm:$0xf]
    %v107 = vld [vmem:[#allocation5 + $0x60] sm:$0xf]
    %v108 = vld [vmem:[#allocation5 + $0x64] sm:$0xf]
    %v109 = vld [vmem:[#allocation5 + $0x68] sm:$0xf]
    %v110 = vld [vmem:[#allocation5 + $0x6c] sm:$0xf]
    %v111 = vld [vmem:[#allocation5 + $0x70] sm:$0xf]
    %v112 = vld [vmem:[#allocation5 + $0x74] sm:$0xf]
    %v113 = vld [vmem:[#allocation5 + $0x78] sm:$0xf]
    %v114 = vld [vmem:[#allocation5 + $0x7c] sm:$0xf]
    %v147 = vunpack.c.l.b16 %v83
    %v148 = vunpack.c.l.b16 %v84
    %v149 = vunpack.c.l.b16 %v85
    %v150 = vunpack.c.l.b16 %v86
    %v151 = vunpack.c.l.b16 %v87
    %v152 = vunpack.c.l.b16 %v88
    %v153 = vunpack.c.l.b16 %v89
    %v154 = vunpack.c.l.b16 %v90
    %v155 = vunpack.c.l.b16 %v91
    %v156 = vunpack.c.l.b16 %v92
    %v157 = vunpack.c.l.b16 %v93
    %v158 = vunpack.c.l.b16 %v94
    %v159 = vunpack.c.l.b16 %v95
    %v160 = vunpack.c.l.b16 %v96
    %v161 = vunpack.c.l.b16 %v97
    %v162 = vunpack.c.l.b16 %v98
    %v163 = vunpack.c.l.b16 %v99
    %v164 = vunpack.c.l.b16 %v100
    %v165 = vunpack.c.l.b16 %v101
    %v166 = vunpack.c.l.b16 %v102
    %v167 = vunpack.c.l.b16 %v103
    %v168 = vunpack.c.l.b16 %v104
    %v169 = vunpack.c.l.b16 %v105
    %v170 = vunpack.c.l.b16 %v106
    %v171 = vunpack.c.l.b16 %v107
    %v172 = vunpack.c.l.b16 %v108
    %v173 = vunpack.c.l.b16 %v109
    %v174 = vunpack.c.l.b16 %v110
    %v175 = vunpack.c.l.b16 %v111
    %v176 = vunpack.c.l.b16 %v112
    %v177 = vunpack.c.l.b16 %v113
    %v178 = vunpack.c.l.b16 %v114
    %v179 = vpack.c.b16 %v148, %v147
    %v180 = vpack.c.b16 %v150, %v149
    %v181 = vpack.c.b16 %v152, %v151
    %v182 = vpack.c.b16 %v154, %v153
    %v183 = vpack.c.b16 %v156, %v155
    %v184 = vpack.c.b16 %v158, %v157
    %v185 = vpack.c.b16 %v160, %v159
    %v186 = vpack.c.b16 %v162, %v161
    %v187 = vpack.c.b16 %v164, %v163
    %v188 = vpack.c.b16 %v166, %v165
    %v189 = vpack.c.b16 %v168, %v167
    %v190 = vpack.c.b16 %v170, %v169
    %v191 = vpack.c.b16 %v172, %v171
    %v192 = vpack.c.b16 %v174, %v173
    %v193 = vpack.c.b16 %v176, %v175
    %v194 = vpack.c.b16 %v178, %v177
    %211 = vmatpush.bf16.msra.mxu0 %v186
    %212 = vmatpush.bf16.msra.mxu0 %v185
    %213 = vmatpush.bf16.msra.mxu0 %v184
    %214 = vmatpush.bf16.msra.mxu0 %v183
    %215 = vmatpush.bf16.msra.mxu0 %v182
    %216 = vmatpush.bf16.msra.mxu0 %v181
    %217 = vmatpush.bf16.msra.mxu0 %v180
    %218 = vmatpush.bf16.msra.mxu0 %v179
    %219 = vmatmul.bf16.gmra.mxu0 %v81
    %v220 = vpop.f32.mrf.mxu0
    %v221 = vadd.f32 0.0, %v220
    %v222 = vpop.f32.mrf.mxu0
    %223 = vdwg.mxu0
    %224 = vmatpush.bf16.msra.mxu0 %v194
    %225 = vmatpush.bf16.msra.mxu0 %v193
    %226 = vmatpush.bf16.msra.mxu0 %v192
    %227 = vmatpush.bf16.msra.mxu0 %v191
    %228 = vmatpush.bf16.msra.mxu0 %v190
    %229 = vmatpush.bf16.msra.mxu0 %v189
    %230 = vmatpush.bf16.msra.mxu0 %v188
    %231 = vmatpush.bf16.msra.mxu0 %v187
    %232 = vmatmul.bf16.gmra.mxu0 %v82
    %v233 = vpop.f32.mrf.mxu0
    %v234 = vadd.f32 %v221, %v233
    %v235 = vpop.f32.mrf.mxu0
    %236 = vdwg.mxu0
    %v237 = vmax.f32 %v234, 0.0
    %v238 = vpack.c.bf16 %v237, %v237
    %v239 = vld [vmem:[#allocation7] sm:$0xf]
    %v240 = vld [vmem:[#allocation7 + $0x4] sm:$0xf]
    %v241 = vld [vmem:[#allocation7 + $0x8] sm:$0xf]
    %v242 = vld [vmem:[#allocation7 + $0xc] sm:$0xf]
    %v243 = vld [vmem:[#allocation7 + $0x10] sm:$0xf]
    %v244 = vld [vmem:[#allocation7 + $0x14] sm:$0xf]
    %v245 = vld [vmem:[#allocation7 + $0x18] sm:$0xf]
    %v246 = vld [vmem:[#allocation7 + $0x1c] sm:$0xf]
    %v247 = vld [vmem:[#allocation7 + $0x20] sm:$0xf]
    %v248 = vld [vmem:[#allocation7 + $0x24] sm:$0xf]
    %v249 = vld [vmem:[#allocation7 + $0x28] sm:$0xf]
    %v250 = vld [vmem:[#allocation7 + $0x2c] sm:$0xf]
    %v251 = vld [vmem:[#allocation7 + $0x30] sm:$0xf]
    %v252 = vld [vmem:[#allocation7 + $0x34] sm:$0xf]
    %v253 = vld [vmem:[#allocation7 + $0x38] sm:$0xf]
    %v254 = vld [vmem:[#allocation7 + $0x3c] sm:$0xf]
    %v271 = vunpack.c.l.b16 %v239
    %v272 = vunpack.c.l.b16 %v240
    %v273 = vunpack.c.l.b16 %v241
    %v274 = vunpack.c.l.b16 %v242
    %v275 = vunpack.c.l.b16 %v243
    %v276 = vunpack.c.l.b16 %v244
    %v277 = vunpack.c.l.b16 %v245
    %v278 = vunpack.c.l.b16 %v246
    %v279 = vunpack.c.l.b16 %v247
    %v280 = vunpack.c.l.b16 %v248
    %v281 = vunpack.c.l.b16 %v249
    %v282 = vunpack.c.l.b16 %v250
    %v283 = vunpack.c.l.b16 %v251
    %v284 = vunpack.c.l.b16 %v252
    %v285 = vunpack.c.l.b16 %v253
    %v286 = vunpack.c.l.b16 %v254
    %v287 = vpack.c.b16 %v272, %v271
    %v288 = vpack.c.b16 %v274, %v273
    %v289 = vpack.c.b16 %v276, %v275
    %v290 = vpack.c.b16 %v278, %v277
    %v291 = vpack.c.b16 %v280, %v279
    %v292 = vpack.c.b16 %v282, %v281
    %v293 = vpack.c.b16 %v284, %v283
    %v294 = vpack.c.b16 %v286, %v285
    %303 = vmatpush.bf16.msra.mxu0 %v294
    %304 = vmatpush.bf16.msra.mxu0 %v293
    %305 = vmatpush.bf16.msra.mxu0 %v292
    %306 = vmatpush.bf16.msra.mxu0 %v291
    %307 = vmatpush.bf16.msra.mxu0 %v290
    %308 = vmatpush.bf16.msra.mxu0 %v289
    %309 = vmatpush.bf16.msra.mxu0 %v288
    %310 = vmatpush.bf16.msra.mxu0 %v287
    %311 = vmatmul.bf16.gmra.mxu0 %v238
    %v312 = vpop.f32.mrf.mxu0
    %v313 = vadd.f32 0.0, %v312
    %v314 = vpop.f32.mrf.mxu0
    %315 = vdwg.mxu0
    %v316 = vmax.f32 %v313, 0.0
    %v317 = vpack.c.bf16 %v316, %v316
    %v318 = vld [vmem:[#allocation8] sm:$0xf]
    %v319 = vld [vmem:[#allocation8 + $0x4] sm:$0xf]
    %v320 = vld [vmem:[#allocation8 + $0x8] sm:$0xf]
    %v321 = vld [vmem:[#allocation8 + $0xc] sm:$0xf]
    %v322 = vld [vmem:[#allocation8 + $0x10] sm:$0xf]
    %v323 = vld [vmem:[#allocation8 + $0x14] sm:$0xf]
    %v324 = vld [vmem:[#allocation8 + $0x18] sm:$0xf]
    %v325 = vld [vmem:[#allocation8 + $0x1c] sm:$0xf]
    %v326 = vld [vmem:[#allocation8 + $0x20] sm:$0xf]
    %v327 = vld [vmem:[#allocation8 + $0x24] sm:$0xf]
    %v328 = vld [vmem:[#allocation8 + $0x28] sm:$0xf]
    %v329 = vld [vmem:[#allocation8 + $0x2c] sm:$0xf]
    %v330 = vld [vmem:[#allocation8 + $0x30] sm:$0xf]
    %v331 = vld [vmem:[#allocation8 + $0x34] sm:$0xf]
    %v332 = vld [vmem:[#allocation8 + $0x38] sm:$0xf]
    %v333 = vld [vmem:[#allocation8 + $0x3c] sm:$0xf]
    %v350 = vunpack.c.l.b16 %v318
    %v351 = vunpack.c.l.b16 %v319
    %v352 = vunpack.c.l.b16 %v320
    %v353 = vunpack.c.l.b16 %v321
    %v354 = vunpack.c.l.b16 %v322
    %v355 = vunpack.c.l.b16 %v323
    %v356 = vunpack.c.l.b16 %v324
    %v357 = vunpack.c.l.b16 %v325
    %v358 = vunpack.c.l.b16 %v326
    %v359 = vunpack.c.l.b16 %v327
    %v360 = vunpack.c.l.b16 %v328
    %v361 = vunpack.c.l.b16 %v329
    %v362 = vunpack.c.l.b16 %v330
    %v363 = vunpack.c.l.b16 %v331
    %v364 = vunpack.c.l.b16 %v332
    %v365 = vunpack.c.l.b16 %v333
    %v366 = vpack.c.b16 %v351, %v350
    %v367 = vpack.c.b16 %v353, %v352
    %v368 = vpack.c.b16 %v355, %v354
    %v369 = vpack.c.b16 %v357, %v356
    %v370 = vpack.c.b16 %v359, %v358
    %v371 = vpack.c.b16 %v361, %v360
    %v372 = vpack.c.b16 %v363, %v362
    %v373 = vpack.c.b16 %v365, %v364
    %382 = vmatpush.bf16.msra.mxu0 %v373
    %383 = vmatpush.bf16.msra.mxu0 %v372
    %384 = vmatpush.bf16.msra.mxu0 %v371
    %385 = vmatpush.bf16.msra.mxu0 %v370
    %386 = vmatpush.bf16.msra.mxu0 %v369
    %387 = vmatpush.bf16.msra.mxu0 %v368
    %388 = vmatpush.bf16.msra.mxu0 %v367
    %389 = vmatpush.bf16.msra.mxu0 %v366
    %390 = vmatmul.bf16.gmra.mxu0 %v317
    %v391 = vpop.f32.mrf.mxu0
    %v392 = vadd.f32 0.0, %v391
    %v393 = vpop.f32.mrf.mxu0
    %394 = vdwg.mxu0
    %395 = vst [vmem:[#allocation10] sm:$0xff] %v392
    // Predicated region
    $region34: #{adapter_forward.1} parent=1 // pred_check
      _
    $region35: #{adapter_forward.1} parent=1 // pred_check_branch
      %397 = sbr.rel (0) target = $region37
    $region36: #{adapter_forward.1} parent=1 // pred_region
      %399 = vsyncadd [#allocation4], 0
      %s401 = sshll.u32 [#allocation10], 4
      %s402 = int_to_ptr.vmem [resolvable:$true] %s401
      %s403 = sshll.u32 %s4, 4
      %s404 = int_to_ptr.hbm [resolvable:$true] %s403
      %406 = dma.vmem_to_hbm [thread:$0]  %s402, 128, %s404, [#allocation4]
    $region37: #{adapter_forward.1} parent=1 // pred_fallthru
      _
    // Predicated region
    $region38: #{adapter_forward.1} parent=1 // pred_check
      _
    $region39: #{adapter_forward.1} parent=1 // pred_check_branch
      %408 = sbr.rel (0) target = $region41
    $region40: #{adapter_forward.1} parent=1 // pred_region
      %410 = dma.done [#allocation4], 128
    $region41: #{adapter_forward.1} parent=1 // pred_fallthru
      _
    %411 = vsyncpa [#allocation3], 1
    %412 = vsyncpa [#allocation6], 1
    %413 = vsyncpa [#allocation9], 1
    %414 = vsyncpa [#allocation4], 1

</llo_original>
